<compile_context>
chip_gen: v7x
topology: tpu7x:2x2x1
jax: 0.10.0
libtpu: 0.0.40
codegen_flags: <defaults>
</compile_context>

<pallas_src>
import math

import jax
import jax.numpy as jnp
from jax.experimental import pallas as pl
from jax.experimental.pallas import tpu as pltpu
from jax.scipy.linalg import block_diag


def _round_up(x, n):
    return ((x + n - 1) // n) * n


def _embedding_kernel(x_ref, wb_ref, wf_ref, o_ref):
    # x_ref:  (tm, (L+1)*feat)        flattened lane-major input rows
    # wb_ref: ((L+1)*feat, 32*(L+1))  block-diagonal fused state/phase weight
    # wf_ref: (32*(L+1), out_pad)     final weight, out cols zero-padded to x128
    # o_ref:  (tm, out_pad)
    x = x_ref[...].astype(wb_ref.dtype)          # in-kernel cast: no extra HBM pass
    h = jnp.dot(x, wb_ref[...], preferred_element_type=jnp.float32)
    h = jnp.maximum(h, 0.0)                      # ReLU before linear_final (as in module)
    out = jnp.dot(h.astype(wf_ref.dtype), wf_ref[...],
                  preferred_element_type=jnp.float32)
    o_ref[...] = out.astype(o_ref.dtype)


def make_fused_weights(w_state, w_phase, w_final, lane_num, *,
                       compute_dtype=jnp.float32):
    """Build (once per parameter set) the fused first-stage block-diagonal weight
    and the lane-padded final weight.  Hoisted out of the per-call path."""
    feat = w_state.shape[0]
    # Same practical restriction as the PyTorch module: both linears are applied to
    # the same sliced feature axis, so phase_dim == state_dim == feat.
    assert w_phase.shape[0] == feat, "state/phase feature dims must match input"
    hidden = 32 * (lane_num + 1)
    assert w_final.shape[0] == hidden
    out_dim = w_final.shape[1]
    out_pad = _round_up(out_dim, 128)            # lane-dense, unmasked output stores

    ws = jnp.asarray(w_state, compute_dtype)
    wp = jnp.asarray(w_phase, compute_dtype)
    w_block = block_diag(*([ws] * lane_num + [wp])).astype(compute_dtype)
    wf_pad = jnp.pad(jnp.asarray(w_final, compute_dtype),
                     ((0, 0), (0, out_pad - out_dim)))
    return w_block, wf_pad, out_dim


def embedding_layer_fused(x, w_block, wf_pad, out_dim, *, tm=2048,
                          out_dtype=jnp.float32, buffering=None,
                          return_padded=False):
    """x: [..., lane_num+1, feat].  Returns [..., out_dim] (or padded layout)."""
    *lead, lane_p1, feat = x.shape
    k, hidden = w_block.shape
    assert lane_p1 * feat == k, "fused weight does not match input lane/feat layout"
    assert wf_pad.shape[0] == hidden
    out_pad = wf_pad.shape[1]

    m = int(math.prod(lead)) if lead else 1
    xf = x.reshape(m, k)                         # contiguous row flatten, no copy pass
    if not jnp.issubdtype(xf.dtype, jnp.floating):
        xf = xf.astype(jnp.float32)              # module does .float() on numpy input

    # Row tile: big enough to amortize the ~0.35us/step overhead, capped at ~m/2 so
    # the ("parallel",) row grid has >=2 steps and both v7x TensorCores are used.
    tm = max(8, _round_up(int(tm), 8))
    half_m = max(8, _round_up(pl.cdiv(m, 2), 8))
    tm_eff = min(tm, half_m)
    grid = (pl.cdiv(m, tm_eff),)                 # ragged grid: no jnp.pad over x

    x_isz = jnp.dtype(xf.dtype).itemsize
    w_isz = jnp.dtype(w_block.dtype).itemsize
    o_isz = jnp.dtype(out_dtype).itemsize

    flops = 2 * m * k * hidden + 2 * m * hidden * out_pad
    bytes_accessed = (m * k * x_isz + m * out_pad * o_isz
                      + (k * hidden + hidden * out_pad) * w_isz)

    # VMEM footprint estimate (lane/sublane padded, double-buffered I/O streams).
    k_l, hid_l = _round_up(k, 128), _round_up(hidden, 128)
    vmem_est = (2 * tm_eff * k_l * x_isz                       # input double buffer
                + 2 * tm_eff * out_pad * o_isz                 # output double buffer
                + tm_eff * hid_l * 4                           # f32 intermediate h
                + 2 * (_round_up(k, 8) * hid_l
                       + _round_up(hidden, 8) * out_pad) * w_isz)  # weights
    vmem_limit = int(min(100 * 2 ** 20, max(32 * 2 ** 20, 2 * vmem_est)))

    if buffering is None:
        x_spec = pl.BlockSpec((tm_eff, k), lambda i: (i, 0))
        o_spec = pl.BlockSpec((tm_eff, out_pad), lambda i: (i, 0))
    else:  # deeper pipelining for the streaming refs; weights stay default
        x_spec = pl.BlockSpec((tm_eff, k), lambda i: (i, 0),
                              pipeline_mode=pl.Buffered(buffering))
        o_spec = pl.BlockSpec((tm_eff, out_pad), lambda i: (i, 0),
                              pipeline_mode=pl.Buffered(buffering))

    out = pl.pallas_call(
        _embedding_kernel,
        out_shape=jax.ShapeDtypeStruct((m, out_pad), out_dtype),
        grid_spec=pltpu.PrefetchScalarGridSpec(
            num_scalar_prefetch=0,
            grid=grid,
            in_specs=[
                x_spec,
                pl.BlockSpec((k, hidden), lambda i: (0, 0)),
                pl.BlockSpec((hidden, out_pad), lambda i: (0, 0)),
            ],
            out_specs=o_spec,
        ),
        compiler_params=pltpu.CompilerParams(
            dimension_semantics=("parallel",),    # rows shard across TCs on v7x
            vmem_limit_bytes=vmem_limit),
        cost_estimate=pl.CostEstimate(flops=flops, transcendentals=0,
                                      bytes_accessed=bytes_accessed),
    )(xf, w_block, wf_pad)

    if return_padded:
        return out.reshape(*lead, out_pad)
    # Column slice only (rows are already exact with the ragged grid); jit this
    # wrapper together with its consumer so XLA fuses the slice into the next op.
    return out[:, :out_dim].reshape(*lead, out_dim)


def embedding_layer(x, w_state, w_phase, w_final, *, tm=2048,
                    compute_dtype=jnp.float32, out_dtype=jnp.float32, **kw):
    """Convenience wrapper: builds the fused weights then calls the kernel.
    Prefer make_fused_weights() once + embedding_layer_fused() in hot loops."""
    lane_num = x.shape[-2] - 1
    w_block, wf_pad, out_dim = make_fused_weights(
        w_state, w_phase, w_final, lane_num, compute_dtype=compute_dtype)
    return embedding_layer_fused(x, w_block, wf_pad, out_dim, tm=tm,
                                 out_dtype=out_dtype, **kw)


def _reference(x, w_state, w_phase, w_final):
    x = jnp.asarray(x, jnp.float32)
    obs, phase = x[..., :-1, :], x[..., -1, :]
    x1 = jnp.einsum("...ld,dk->...lk", obs, w_state)
    x1 = x1.reshape(*x1.shape[:-2], -1)
    x2 = jnp.einsum("...d,dk->...k", phase, w_phase)
    h = jnp.concatenate([x1, x2], axis=-1)
    return jnp.maximum(h, 0.0) @ w_final


if __name__ == "__main__":
    # module config: input_dim = (phase_dim, state_dim, lane_num), output_dim
    phase_dim = state_dim = 12   # both linears act on the same last-dim features
    lane_num = 4
    output_dim = 64

    key = jax.random.PRNGKey(0)
    k_x1, k_x2, k_x3, k_ws, k_wp, k_wf = jax.random.split(key, 6)

    # deterministic parameter init (uniform ~ 1/sqrt(fan_in), stored [in, out])
    w_state = jax.random.uniform(k_ws, (state_dim, 32), jnp.float32,
                                 -1.0, 1.0) / jnp.sqrt(jnp.float32(state_dim))
    w_phase = jax.random.uniform(k_wp, (phase_dim, 32), jnp.float32,
                                 -1.0, 1.0) / jnp.sqrt(jnp.float32(phase_dim))
    hidden = 32 * (lane_num + 1)
    w_final = jax.random.uniform(k_wf, (hidden, output_dim), jnp.float32,
                                 -1.0, 1.0) / jnp.sqrt(jnp.float32(hidden))

    # fused weights built ONCE and reused across all calls below (hoisted path)
    wb_f32, wf_f32, odim = make_fused_weights(w_state, w_phase, w_final, lane_num,
                                              compute_dtype=jnp.float32)

    # 4-D branch: x = [batch, node_num, lane_num+1, feat]
    batch, node_num = 2, 8
    x4 = jax.random.normal(k_x1, (batch, node_num, lane_num + 1, state_dim),
                           jnp.float32)
    out4 = embedding_layer_fused(x4, wb_f32, wf_f32, odim)
    out4 = jax.block_until_ready(out4)
    ref4 = _reference(x4, w_state, w_phase, w_final)
    assert out4.shape == (batch, node_num, output_dim)
    assert jnp.allclose(out4, ref4, atol=1e-4, rtol=1e-4)

    # 5-D branch (time dim): x = [batch, seq, node_num, lane_num+1, feat]
    # small tm so the kernel exercises a multi-step grid.
    seq_len = 3
    x5 = jax.random.normal(k_x2, (batch, seq_len, node_num, lane_num + 1,
                                  state_dim), jnp.float32)
    out5 = embedding_layer_fused(x5, wb_f32, wf_f32, odim, tm=16)
    out5 = jax.block_until_ready(out5)
    ref5 = _reference(x5, w_state, w_phase, w_final)
    assert out5.shape == (batch, seq_len, node_num, output_dim)
    assert jnp.allclose(out5, ref5, atol=1e-4, rtol=1e-4)

    # ragged row count (m=14 not a multiple of the 8-row tile) -> exercises the
    # ragged-grid / masked partial last block path (no jnp.pad anywhere).
    x4r = jax.random.normal(k_x3, (batch, 7, lane_num + 1, state_dim), jnp.float32)
    out4r = jax.block_until_ready(embedding_layer_fused(x4r, wb_f32, wf_f32, odim))
    ref4r = _reference(x4r, w_state, w_phase, w_final)
    assert out4r.shape == (batch, 7, output_dim)
    assert jnp.allclose(out4r, ref4r, atol=1e-4, rtol=1e-4)

    # bf16 MXU-operand path (v6e/v7x default choice): weights prepared in bf16 once,
    # x cast in-kernel, f32 accumulation; relaxed tolerances.
    wb_bf, wf_bf, _ = make_fused_weights(w_state, w_phase, w_final, lane_num,
                                         compute_dtype=jnp.bfloat16)
    out4b = jax.block_until_ready(embedding_layer_fused(x4, wb_bf, wf_bf, odim))
    assert out4b.shape == (batch, node_num, output_dim)
    assert jnp.allclose(out4b, ref4, atol=8e-2, rtol=8e-2)

    print("KERNEL_OK")
</pallas_src>

<mosaic_0001>
module attributes {stable_mosaic.version = 11 : i64} {
  func.func @_embedding_kernel(%arg0: i32, %arg1: memref<8x60xf32, #tpu.memory_space<vmem>>, %arg2: memref<60x160xf32, #tpu.memory_space<vmem>>, %arg3: memref<160x128xf32, #tpu.memory_space<vmem>>, %arg4: memref<8x128xf32, #tpu.memory_space<vmem>>) attributes {dimension_semantics = [#tpu.dimension_semantics<parallel>], iteration_bounds = array<i64: 2>, scalar_prefetch = 0 : i64, scratch_operands = 0 : i64, tpu.core_type = #tpu.core_type<tc>, window_params = [{transform_indices = @transform_0, window_bounds = array<i64: 8, 60>}, {pipeline_mode = #tpu.pipeline_mode<synchronous>, transform_indices = @transform_1, window_bounds = array<i64: 60, 160>}, {pipeline_mode = #tpu.pipeline_mode<synchronous>, transform_indices = @transform_2, window_bounds = array<i64: 160, 128>}, {transform_indices = @transform_3, window_bounds = array<i64: 8, 128>}]} {
    %c0 = arith.constant 0 : index
    %c0_0 = arith.constant 0 : index
    %0 = vector.load %arg1[%c0, %c0_0] : memref<8x60xf32, #tpu.memory_space<vmem>>, vector<8x60xf32>
    %c0_1 = arith.constant 0 : index
    %c0_2 = arith.constant 0 : index
    %1 = vector.load %arg2[%c0_1, %c0_2] : memref<60x160xf32, #tpu.memory_space<vmem>>, vector<60x160xf32>
    %cst = arith.constant dense<0.000000e+00> : vector<8x160xf32>
    %2 = tpu.matmul %0, %1, %cst {dimension_numbers = #tpu.dot_dimension_numbers<[1], [0], [0], [1], [0, 0, 1, 1], [], []>} : vector<8x60xf32>, vector<60x160xf32>, vector<8x160xf32> -> vector<8x160xf32>
    %cst_3 = arith.constant 0.000000e+00 : f32
    %3 = vector.broadcast %cst_3 : f32 to vector<8x160xf32>
    %4 = arith.maximumf %2, %3 : vector<8x160xf32>
    %c0_4 = arith.constant 0 : index
    %c0_5 = arith.constant 0 : index
    %5 = vector.load %arg3[%c0_4, %c0_5] : memref<160x128xf32, #tpu.memory_space<vmem>>, vector<160x128xf32>
    %cst_6 = arith.constant dense<0.000000e+00> : vector<8x128xf32>
    %6 = tpu.matmul %4, %5, %cst_6 {dimension_numbers = #tpu.dot_dimension_numbers<[1], [0], [0], [1], [0, 0, 1, 1], [], []>} : vector<8x160xf32>, vector<160x128xf32>, vector<8x128xf32> -> vector<8x128xf32>
    %c0_7 = arith.constant 0 : index
    %c0_8 = arith.constant 0 : index
    %7 = vector.load %arg4[%c0_7, %c0_8] : memref<8x128xf32, #tpu.memory_space<vmem>>, vector<8x128xf32>
    tpu.vector_store %arg4[%c0_7, %c0_8], %6 {strides = array<i32>} : memref<8x128xf32, #tpu.memory_space<vmem>>, vector<8x128xf32>,
    return
  }
  func.func @transform_0(%arg0: i32) -> (i32, i32) {
    %c0_i32 = arith.constant 0 : i32
    %c0_i32_0 = arith.constant 0 : i32
    return %arg0, %c0_i32 : i32, i32
  }
  func.func @transform_1(%arg0: i32) -> (i32, i32) {
    %c0_i32 = arith.constant 0 : i32
    %c0_i32_0 = arith.constant 0 : i32
    %c0_i32_1 = arith.constant 0 : i32
    return %c0_i32, %c0_i32_0 : i32, i32
  }
  func.func @transform_2(%arg0: i32) -> (i32, i32) {
    %c0_i32 = arith.constant 0 : i32
    %c0_i32_0 = arith.constant 0 : i32
    %c0_i32_1 = arith.constant 0 : i32
    return %c0_i32, %c0_i32_0 : i32, i32
  }
  func.func @transform_3(%arg0: i32) -> (i32, i32) {
    %c0_i32 = arith.constant 0 : i32
    %c0_i32_0 = arith.constant 0 : i32
    return %arg0, %c0_i32 : i32, i32
  }
}

</mosaic_0001>

<llo_original>
// kernel: tpu_custom_call.1
$region0: #{tpu_custom_call.1}
  #allocation0 [shape = 'u32[]', space=smem, size = 0x4, offset = 0x4, fixed_abs, tag = 'smem constant byte address 0x4 - core index']
  #allocation1 [shape = 'u32[144,128]{1,0:T(1,128)}', space=vmem, size = 0x12000, scoped, tag = 'internal scratch']
  %s0 = inlined_call_operand.hbm [shape: f32[16,60], index: 0, kind: input, shape index: {}]
  %s1 = inlined_call_operand.hbm [shape: f32[60,160], index: 1, kind: input, shape index: {}]
  %s2 = inlined_call_operand.hbm [shape: f32[160,128], index: 2, kind: input, shape index: {}]
  %s3 = inlined_call_operand.hbm [shape: f32[16,128], index: 3, kind: output, shape index: {}]
  %s4 = sld [smem:[#allocation0]]
  $region57: #{tpu_custom_call.1} parent=0
    _
  %s6 = ssub.s32 1, %s4
  %s7 = scalar_select 0, %s6, %s4
  $region1: #{tpu_custom_call.1} parent=0
    #allocation2 [shape = 'u8[8192]{0}', space=vmem, size = 0x2000, scoped, tag = 'input window, operand 0']
    #allocation3 [shape = 's32[2]{0}', space=sflag, size = 0x8, scoped, tag = 'scoped memory for tpu_custom_call.1']
    #allocation4 [shape = 's32[2]{0}', space=sflag, size = 0x8, scoped, tag = 'scoped memory for tpu_custom_call.1']
    #allocation5 [shape = 'u8[65536]{0}', space=vmem, size = 0x10000, scoped, tag = 'input window, operand 1, single buffered']
    #allocation6 [shape = 's32[1]{0}', space=sflag, size = 0x4, scoped, tag = 'scoped memory for tpu_custom_call.1']
    #allocation7 [shape = 'u8[81920]{0}', space=vmem, size = 0x14000, scoped, tag = 'input window, operand 2, single buffered']
    #allocation8 [shape = 'u8[8192]{0}', space=vmem, size = 0x2000, scoped, tag = 'output window, operand 0']
    %8 = vsyncpa [#allocation3], 0
    %s9 = scalar_lea.sflag [#allocation3], 1
    %10 = vsyncpa %s9, 0
    %11 = vsyncpa [#allocation6], 0
    %12 = vsyncpa [#allocation4], 0
    %s13 = scalar_lea.sflag [#allocation4], 1
    %14 = vsyncpa %s13, 0
    loop: start=0, step=1, limit=4
    $region2: #{tpu_custom_call.1} parent=1 // loop_pre_header
      _
    $region3: #{tpu_custom_call.1} parent=1 // loop_header
      %s16 = sphi 0, %s20
      %p17 = scmp.ge.s32.totalorder %s16, 4
      %s26 = sphi 0, %s28
      %s29 = sphi 0, %s26
      %s30 = sphi 0, %s29
      %s46 = sphi 0, %s30
      %s50 = sphi 0, %s50
      %s52 = sphi 0, %s50
      %s53 = sphi 0, %s52
      %s67 = sphi 0, %s53
      %s71 = sphi 0, %s71
      %s73 = sphi 0, %s71
      %s74 = sphi 0, %s73
      %s88 = sphi 0, %s74
      %s94 = sphi 0, %s96
      %s97 = sphi 0, %s94
      %s98 = sphi 0, %s97
      %s114 = sphi 0, %s98
    $region4: #{tpu_custom_call.1} parent=1 // loop_header_branch
      %19 = sbr.rel (%p17) target = $region8
    $region5: #{tpu_custom_call.1} parent=1 // loop_body
      %s21 = ssub.s32 %s16, 1
      %s22 = ssub.s32 %s16, 2
      %s23 = sadd.s32 %s16, 1
      %s24 = ssub.s32 %s16, %s23
      %p25 = scmp.eq.s32.totalorder %s24, 0
      %s27 = sadd.s32 %s26, 1
      %s28 = scalar_select %p25, %s26, %s27
      %p31 = pneg %p25
      %p32 = scmp.eq.s32.totalorder %s16, 1
      %p33 = por %p31, %p32
      %p34 = scmp.ne.s32.totalorder %s26, %s29
      %p35 = scmp.eq.s32.totalorder %s16, 0
      %p36 = por %p34, %p35
      %p37 = scmp.ne.s32.totalorder %s26, %s29
      %p38 = scmp.eq.s32.totalorder %s21, 1
      %p39 = por %p37, %p38
      %p40 = scmp.ne.s32.totalorder %s29, %s30
      %p41 = scmp.eq.s32.totalorder %s21, 0
      %p42 = por %p40, %p41
      %p43 = scmp.ne.s32.totalorder %s29, %s30
      %p44 = scmp.eq.s32.totalorder %s22, 1
      %p45 = por %p43, %p44
      %p47 = scmp.ne.s32.totalorder %s30, %s46
      %p48 = scmp.eq.s32.totalorder %s22, 0
      %p49 = por %p47, %p48
      %s51 = sadd.s32 %s50, 1
      %p54 = scmp.eq.s32.totalorder %s16, 1
      %p55 = scmp.ne.s32.totalorder %s50, %s52
      %p56 = scmp.eq.s32.totalorder %s16, 0
      %p57 = por %p55, %p56
      %p58 = scmp.ne.s32.totalorder %s50, %s52
      %p59 = scmp.eq.s32.totalorder %s21, 1
      %p60 = por %p58, %p59
      %p61 = scmp.ne.s32.totalorder %s52, %s53
      %p62 = scmp.eq.s32.totalorder %s21, 0
      %p63 = por %p61, %p62
      %p64 = scmp.ne.s32.totalorder %s52, %s53
      %p65 = scmp.eq.s32.totalorder %s22, 1
      %p66 = por %p64, %p65
      %p68 = scmp.ne.s32.totalorder %s53, %s67
      %p69 = scmp.eq.s32.totalorder %s22, 0
      %p70 = por %p68, %p69
      %s72 = sadd.s32 %s71, 1
      %p75 = scmp.eq.s32.totalorder %s16, 1
      %p76 = scmp.ne.s32.totalorder %s71, %s73
      %p77 = scmp.eq.s32.totalorder %s16, 0
      %p78 = por %p76, %p77
      %p79 = scmp.ne.s32.totalorder %s71, %s73
      %p80 = scmp.eq.s32.totalorder %s21, 1
      %p81 = por %p79, %p80
      %p82 = scmp.ne.s32.totalorder %s73, %s74
      %p83 = scmp.eq.s32.totalorder %s21, 0
      %p84 = por %p82, %p83
      %p85 = scmp.ne.s32.totalorder %s73, %s74
      %p86 = scmp.eq.s32.totalorder %s22, 1
      %p87 = por %p85, %p86
      %p89 = scmp.ne.s32.totalorder %s74, %s88
      %p90 = scmp.eq.s32.totalorder %s22, 0
      %p91 = por %p89, %p90
      %s92 = ssub.s32 %s16, %s23
      %p93 = scmp.eq.s32.totalorder %s92, 0
      %s95 = sadd.s32 %s94, 1
      %s96 = scalar_select %p93, %s94, %s95
      %p99 = pneg %p93
      %p100 = scmp.eq.s32.totalorder %s16, 1
      %p101 = por %p99, %p100
      %p102 = scmp.ne.s32.totalorder %s94, %s97
      %p103 = scmp.eq.s32.totalorder %s16, 0
      %p104 = por %p102, %p103
      %p105 = scmp.ne.s32.totalorder %s94, %s97
      %p106 = scmp.eq.s32.totalorder %s21, 1
      %p107 = por %p105, %p106
      %p108 = scmp.ne.s32.totalorder %s97, %s98
      %p109 = scmp.eq.s32.totalorder %s21, 0
      %p110 = por %p108, %p109
      %p111 = scmp.ne.s32.totalorder %s97, %s98
      %p112 = scmp.eq.s32.totalorder %s22, 1
      %p113 = por %p111, %p112
      %p115 = scmp.ne.s32.totalorder %s98, %s114
      %p116 = scmp.eq.s32.totalorder %s22, 0
      %p117 = por %p115, %p116
      %p118 = scmp.le.s32.totalorder 1, %s16
      %p119 = scmp.lt.s32.totalorder %s16, 3
      %p120 = pnand %p118, %p119
      %p121 = pneg %p120
      // Predicated region
      $region9: #{tpu_custom_call.1} parent=5 // pred_check
        _
      $region10: #{tpu_custom_call.1} parent=5 // pred_check_branch
        %123 = sbr.rel (%p120) target = $region12
      $region11: #{tpu_custom_call.1} parent=5 // pred_region
        %s124 = ssub.s32 %s16, 1
        // Predicated region
        $region13: #{tpu_custom_call.1} parent=11 // pred_check
          %p125 = pneg %p63
        $region14: #{tpu_custom_call.1} parent=11 // pred_check_branch
          %127 = sbr.rel (%p125) target = $region16
        $region15: #{tpu_custom_call.1} parent=11 // pred_region
          %s129 = ssub.s32 2048, 2048
          %130 = vsyncadd [#allocation6], %s129
          %s131 = sshll.u32 [#allocation5], 4
          %s132 = int_to_ptr.vmem [resolvable:$true] %s131
          %137 = dma.hbm_to_vmem [thread:$0]  %s1, 2048, %s132, [#allocation6], 256, 256, 16
        $region16: #{tpu_custom_call.1} parent=11 // pred_fallthru
          _
        // Predicated region
        $region17: #{tpu_custom_call.1} parent=11 // pred_check
          %p138 = pneg %p84
        $region18: #{tpu_custom_call.1} parent=11 // pred_check_branch
          %140 = sbr.rel (%p138) target = $region20
        $region19: #{tpu_custom_call.1} parent=11 // pred_region
          %s142 = ssub.s32 2560, 2560
          %143 = vsyncadd [#allocation6], %s142
          %s144 = sshll.u32 [#allocation7], 4
          %s145 = int_to_ptr.vmem [resolvable:$true] %s144
          %150 = dma.hbm_to_vmem [thread:$0]  %s2, 2560, %s145, [#allocation6], 128, 128, 8
        $region20: #{tpu_custom_call.1} parent=11 // pred_fallthru
          _
      $region12: #{tpu_custom_call.1} parent=5 // pred_fallthru
        _
      %p151 = scmp.lt.s32.totalorder %s16, 2
      // Predicated region
      $region21: #{tpu_custom_call.1} parent=5 // pred_check
        %p152 = pneg %p151
      $region22: #{tpu_custom_call.1} parent=5 // pred_check_branch
        %154 = sbr.rel (%p152) target = $region24
      $region23: #{tpu_custom_call.1} parent=5 // pred_region
        // Predicated region
        $region25: #{tpu_custom_call.1} parent=23 // pred_check
          %p155 = pneg %p36
        $region26: #{tpu_custom_call.1} parent=23 // pred_check_branch
          %157 = sbr.rel (%p155) target = $region28
        $region27: #{tpu_custom_call.1} parent=23 // pred_region
          %s158 = sand.u32 %s26, 1
          %s159 = scalar_lea.sflag [#allocation3], %s158
          %s160 = sand.u32 %s26, 1
          %s161 = smul.addr %s160, 8
          %s162 = scalar_lea.vmem [#allocation2], %s161
          %s164 = ssub.s32 128, 128
          %165 = vsyncadd %s159, %s164
          %s166 = smul.addr %s16, 128
          %s167 = scalar_lea.hbm %s0, %s166
          %s169 = sshll.u32 %s162, 4
          %s170 = int_to_ptr.vmem [resolvable:$true] %s169
          %172 = dma.hbm_to_vmem [thread:$0]  %s167, 128, %s170, %s159
        $region28: #{tpu_custom_call.1} parent=23 // pred_fallthru
          _
      $region24: #{tpu_custom_call.1} parent=5 // pred_fallthru
        _
      %p173 = scmp.le.s32.totalorder 1, %s16
      %p174 = scmp.lt.s32.totalorder %s16, 3
      %p175 = pnand %p173, %p174
      %p176 = pneg %p175
      // Predicated region
      $region29: #{tpu_custom_call.1} parent=5 // pred_check
        _
      $region30: #{tpu_custom_call.1} parent=5 // pred_check_branch
        %178 = sbr.rel (%p175) target = $region32
      $region31: #{tpu_custom_call.1} parent=5 // pred_region
        %s179 = ssub.s32 %s16, 1
        %s180 = sand.u32 %s29, 1
        %s181 = scalar_lea.sflag [#allocation3], %s180
        %s182 = sand.u32 %s29, 1
        %s183 = smul.addr %s182, 8
        %s184 = scalar_lea.vmem [#allocation2], %s183
        // Predicated region
        $region33: #{tpu_custom_call.1} parent=31 // pred_check
          %p185 = pneg %p42
        $region34: #{tpu_custom_call.1} parent=31 // pred_check_branch
          %187 = sbr.rel (%p185) target = $region36
        $region35: #{tpu_custom_call.1} parent=31 // pred_region
          %188 = dma.done %s181, 128
        $region36: #{tpu_custom_call.1} parent=31 // pred_fallthru
          _
        // Predicated region
        $region37: #{tpu_custom_call.1} parent=31 // pred_check
          %p189 = pneg %p63
        $region38: #{tpu_custom_call.1} parent=31 // pred_check_branch
          %191 = sbr.rel (%p189) target = $region40
        $region39: #{tpu_custom_call.1} parent=31 // pred_region
          %192 = dma.done [#allocation6], 2048
        $region40: #{tpu_custom_call.1} parent=31 // pred_fallthru
          _
        // Predicated region
        $region41: #{tpu_custom_call.1} parent=31 // pred_check
          %p193 = pneg %p84
        $region42: #{tpu_custom_call.1} parent=31 // pred_check_branch
          %195 = sbr.rel (%p193) target = $region44
        $region43: #{tpu_custom_call.1} parent=31 // pred_region
          %196 = dma.done [#allocation6], 2560
        $region44: #{tpu_custom_call.1} parent=31 // pred_fallthru
          _
        %s197 = sand.u32 %s29, 1
        %s198 = scalar_lea.sflag [#allocation3], %s197
        %s199 = sand.u32 %s29, 1
        %s200 = smul.addr %s199, 8
        %s201 = scalar_lea.vmem [#allocation2], %s200
        %p202 = pneg %p42
        %p203 = pneg %p39
        %p204 = pneg %p63
        %p205 = pneg %p60
        %p206 = pneg %p84
        %p207 = pneg %p81
        %p208 = pneg %p110
        %p209 = pneg %p107
        %s210 = sand.u32 %s97, 1
        %s211 = scalar_lea.sflag [#allocation4], %s210
        %s212 = sand.u32 %s97, 1
        %s213 = smul.addr %s212, 8
        %s214 = scalar_lea.vmem [#allocation8], %s213
        %v215 = vld [vmem:[%s184] sm:$0xff]
        %v216 = vld [vmem:[#allocation5] sm:$0xff]
        %v217 = vld [vmem:[#allocation5 + $0x8] sm:$0xff]
        %v218 = vld [vmem:[#allocation5 + $0x10] sm:$0xff]
        %v219 = vld [vmem:[#allocation5 + $0x18] sm:$0xff]
        %v220 = vld [vmem:[#allocation5 + $0x20] sm:$0xff]
        %v221 = vld [vmem:[#allocation5 + $0x28] sm:$0xff]
        %v222 = vld [vmem:[#allocation5 + $0x30] sm:$0xff]
        %v223 = vld [vmem:[#allocation5 + $0x38] sm:$0xff]
        %v224 = vld [vmem:[#allocation5 + $0x40] sm:$0xff]
        %v225 = vld [vmem:[#allocation5 + $0x48] sm:$0xff]
        %v226 = vld [vmem:[#allocation5 + $0x50] sm:$0xff]
        %v227 = vld [vmem:[#allocation5 + $0x58] sm:$0xff]
        %v228 = vld [vmem:[#allocation5 + $0x60] sm:$0xff]
        %v229 = vld [vmem:[#allocation5 + $0x68] sm:$0xff]
        %v230 = vld [vmem:[#allocation5 + $0x70] sm:$0xf]
        %v231 = vld [vmem:[#allocation5 + $0x78] sm:$0xf]
        %vm232 = vcmask 490496
        %v234 = vsel %vm232, %v215, 0
        %vm236 = vcmask 1043456
        %v238 = vsel %vm236, %v230, 0
        %v241 = vsel %vm236, %v231, 0
        %243 = vmatprep.subr.mxu0 %v217
        %244 = vmatpush1.msra.mxu0 %v216
        %245 = vmatprep.subr.mxu0 %v219
        %246 = vmatpush1.msra.mxu0 %v218
        %247 = vmatprep.subr.mxu0 %v221
        %248 = vmatpush1.msra.mxu0 %v220
        %249 = vmatprep.subr.mxu0 %v223
        %250 = vmatpush1.msra.mxu0 %v222
        %251 = vmatprep.subr.mxu0 %v225
        %252 = vmatpush1.msra.mxu0 %v224
        %253 = vmatprep.subr.mxu0 %v227
        %254 = vmatpush1.msra.mxu0 %v226
        %255 = vmatprep.subr.mxu0 %v229
        %256 = vmatpush1.msra.mxu0 %v228
        %257 = vmatprep.subr.mxu0 %v241
        %258 = vmatpush1.msra.mxu0 %v238
        %259 = vmatprep.subr.mxu0 0.0
        %260 = vmatpush1.msra.mxu0 0.0
        %261 = vmatprep.subr.mxu0 0.0
        %262 = vmatpush1.msra.mxu0 0.0
        %263 = vmatprep.subr.mxu0 0.0
        %264 = vmatpush1.msra.mxu0 0.0
        %265 = vmatprep.subr.mxu0 0.0
        %266 = vmatpush1.msra.mxu0 0.0
        %267 = vmatprep.subr.mxu0 0.0
        %268 = vmatpush1.msra.mxu0 0.0
        %269 = vmatprep.subr.mxu0 0.0
        %270 = vmatpush1.msra.mxu0 0.0
        %271 = vmatprep.subr.mxu0 0.0
        %272 = vmatpush1.msra.mxu0 0.0
        %273 = vmatprep.subr.mxu0 0.0
        %274 = vmatpush1.msra.mxu0 0.0
        %275 = vmatprep.subr.mxu0 0.0
        %276 = vmatpush1.msra.mxu0 0.0
        %277 = vmatprep.subr.mxu0 0.0
        %278 = vmatpush1.msra.mxu0 0.0
        %279 = vmatprep.subr.mxu0 0.0
        %280 = vmatpush1.msra.mxu0 0.0
        %281 = vmatprep.subr.mxu0 0.0
        %282 = vmatpush1.msra.mxu0 0.0
        %283 = vmatprep.subr.mxu0 0.0
        %284 = vmatpush1.msra.mxu0 0.0
        %285 = vmatprep.subr.mxu0 0.0
        %286 = vmatpush1.msra.mxu0 0.0
        %287 = vmatprep.subr.mxu0 0.0
        %288 = vmatpush1.msra.mxu0 0.0
        %289 = vmatprep.subr.mxu0 0.0
        %290 = vmatpush1.msra.mxu0 0.0
        %291 = vmatprep.subr.mxu0 0.0
        %292 = vmatpush1.msra.mxu0 0.0
        %293 = vmatprep.subr.mxu0 0.0
        %294 = vmatpush1.msra.mxu0 0.0
        %295 = vmatprep.subr.mxu0 0.0
        %296 = vmatpush1.msra.mxu0 0.0
        %297 = vmatprep.subr.mxu0 0.0
        %298 = vmatpush1.msra.mxu0 0.0
        %299 = vmatprep.subr.mxu0 0.0
        %300 = vmatpush1.msra.mxu0 0.0
        %301 = vmatprep.subr.mxu0 0.0
        %302 = vmatpush1.msra.mxu0 0.0
        %303 = vmatprep.subr.mxu0 0.0
        %304 = vmatpush1.msra.mxu0 0.0
        %305 = vmatprep.subr.mxu0 0.0
        %306 = vmatpush1.msra.mxu0 0.0
        %307 = vmatprep.mubr.f32.mxu0 0.0
        %308 = vmatmul.mubr.f32.gmra.mrb[0].mxu0 %v234
        %v309 = vpop.f32.mrb[0].mxu0
        %v310 = vadd.f32 0.0, %v309
        %v311 = vpop.f32.mrb[0].mxu0
        %v312 = vadd.f32 0.0, %v311
        %313 = vdwg.mxu0
        %v314 = vmax.f32 %v310, 0.0
        %v315 = vmax.f32 %v312, 0.0
        %v316 = vld [vmem:[#allocation7] sm:$0xff]
        %v317 = vld [vmem:[#allocation7 + $0x8] sm:$0xff]
        %v318 = vld [vmem:[#allocation7 + $0x10] sm:$0xff]
        %v319 = vld [vmem:[#allocation7 + $0x18] sm:$0xff]
        %v320 = vld [vmem:[#allocation7 + $0x20] sm:$0xff]
        %v321 = vld [vmem:[#allocation7 + $0x28] sm:$0xff]
        %v322 = vld [vmem:[#allocation7 + $0x30] sm:$0xff]
        %v323 = vld [vmem:[#allocation7 + $0x38] sm:$0xff]
        %v324 = vld [vmem:[#allocation7 + $0x40] sm:$0xff]
        %v325 = vld [vmem:[#allocation7 + $0x48] sm:$0xff]
        %v326 = vld [vmem:[#allocation7 + $0x50] sm:$0xff]
        %v327 = vld [vmem:[#allocation7 + $0x58] sm:$0xff]
        %v328 = vld [vmem:[#allocation7 + $0x60] sm:$0xff]
        %v329 = vld [vmem:[#allocation7 + $0x68] sm:$0xff]
        %v330 = vld [vmem:[#allocation7 + $0x70] sm:$0xff]
        %v331 = vld [vmem:[#allocation7 + $0x78] sm:$0xff]
        %v332 = vld [vmem:[#allocation7 + $0x80] sm:$0xff]
        %v333 = vld [vmem:[#allocation7 + $0x88] sm:$0xff]
        %v334 = vld [vmem:[#allocation7 + $0x90] sm:$0xff]
        %v335 = vld [vmem:[#allocation7 + $0x98] sm:$0xff]
        %vm336 = vcmask 261120
        %v338 = vsel %vm336, %v315, 0
        %340 = vmatprep.subr.mxu0 0.0
        %341 = vmatpush1.msra.mxu0 %v316
        %342 = vmatprep.subr.mxu0 0.0
        %343 = vmatpush1.msra.mxu0 %v317
        %344 = vmatprep.subr.mxu0 0.0
        %345 = vmatpush1.msra.mxu0 %v318
        %346 = vmatprep.subr.mxu0 0.0
        %347 = vmatpush1.msra.mxu0 %v319
        %348 = vmatprep.subr.mxu0 0.0
        %349 = vmatpush1.msra.mxu0 %v320
        %350 = vmatprep.subr.mxu0 0.0
        %351 = vmatpush1.msra.mxu0 %v321
        %352 = vmatprep.subr.mxu0 0.0
        %353 = vmatpush1.msra.mxu0 %v322
        %354 = vmatprep.subr.mxu0 0.0
        %355 = vmatpush1.msra.mxu0 %v323
        %356 = vmatprep.subr.mxu0 0.0
        %357 = vmatpush1.msra.mxu0 %v324
        %358 = vmatprep.subr.mxu0 0.0
        %359 = vmatpush1.msra.mxu0 %v325
        %360 = vmatprep.subr.mxu0 0.0
        %361 = vmatpush1.msra.mxu0 %v326
        %362 = vmatprep.subr.mxu0 0.0
        %363 = vmatpush1.msra.mxu0 %v327
        %364 = vmatprep.subr.mxu0 0.0
        %365 = vmatpush1.msra.mxu0 %v328
        %366 = vmatprep.subr.mxu0 0.0
        %367 = vmatpush1.msra.mxu0 %v329
        %368 = vmatprep.subr.mxu0 0.0
        %369 = vmatpush1.msra.mxu0 %v330
        %370 = vmatprep.subr.mxu0 0.0
        %371 = vmatpush1.msra.mxu0 %v331
        %372 = vmatprep.subr.mxu0 0.0
        %373 = vmatpush1.msra.mxu0 %v332
        %374 = vmatprep.subr.mxu0 0.0
        %375 = vmatpush1.msra.mxu0 %v333
        %376 = vmatprep.subr.mxu0 0.0
        %377 = vmatpush1.msra.mxu0 %v334
        %378 = vmatprep.subr.mxu0 0.0
        %379 = vmatpush1.msra.mxu0 %v335
        %380 = vmatprep.subr.mxu0 0.0
        %381 = vmatpush1.msra.mxu0 0.0
        %382 = vmatprep.subr.mxu0 0.0
        %383 = vmatpush1.msra.mxu0 0.0
        %384 = vmatprep.subr.mxu0 0.0
        %385 = vmatpush1.msra.mxu0 0.0
        %386 = vmatprep.subr.mxu0 0.0
        %387 = vmatpush1.msra.mxu0 0.0
        %388 = vmatprep.subr.mxu0 0.0
        %389 = vmatpush1.msra.mxu0 0.0
        %390 = vmatprep.subr.mxu0 0.0
        %391 = vmatpush1.msra.mxu0 0.0
        %392 = vmatprep.subr.mxu0 0.0
        %393 = vmatpush1.msra.mxu0 0.0
        %394 = vmatprep.subr.mxu0 0.0
        %395 = vmatpush1.msra.mxu0 0.0
        %396 = vmatprep.subr.mxu0 0.0
        %397 = vmatpush1.msra.mxu0 0.0
        %398 = vmatprep.subr.mxu0 0.0
        %399 = vmatpush1.msra.mxu0 0.0
        %400 = vmatprep.subr.mxu0 0.0
        %401 = vmatpush1.msra.mxu0 0.0
        %402 = vmatprep.subr.mxu0 0.0
        %403 = vmatpush1.msra.mxu0 0.0
        %404 = vmatprep.mubr.f32.mxu0 %v338
        %405 = vmatmul.mubr.f32.gmra.mrb[0].mxu0 %v314
        %v406 = vpop.f32.mrb[0].mxu0
        %v407 = vadd.f32 0.0, %v406
        %v408 = vpop.f32.mrb[0].mxu0
        %409 = vdwg.mxu0
        %410 = vst [vmem:[%s214] sm:$0xff] %v407
        %s411 = sand.u32 %s97, 1
        %s412 = scalar_lea.sflag [#allocation4], %s411
        %s413 = sand.u32 %s97, 1
        %s414 = smul.addr %s413, 8
        %s415 = scalar_lea.vmem [#allocation8], %s414
        // Predicated region
        $region45: #{tpu_custom_call.1} parent=31 // pred_check
          %p416 = pneg %p107
        $region46: #{tpu_custom_call.1} parent=31 // pred_check_branch
          %418 = sbr.rel (%p416) target = $region48
        $region47: #{tpu_custom_call.1} parent=31 // pred_region
          %s420 = ssub.s32 128, 128
          %421 = vsyncadd %s412, %s420
          %s422 = smul.addr %s21, 128
          %s423 = scalar_lea.hbm %s3, %s422
          %s425 = sshll.u32 %s415, 4
          %s426 = int_to_ptr.vmem [resolvable:$true] %s425
          %428 = dma.vmem_to_hbm [thread:$0]  %s426, 128, %s423, %s412
        $region48: #{tpu_custom_call.1} parent=31 // pred_fallthru
          _
      $region32: #{tpu_custom_call.1} parent=5 // pred_fallthru
        _
      %p429 = scmp.le.s32.totalorder 2, %s16
      // Predicated region
      $region49: #{tpu_custom_call.1} parent=5 // pred_check
        %p430 = pneg %p429
      $region50: #{tpu_custom_call.1} parent=5 // pred_check_branch
        %432 = sbr.rel (%p430) target = $region52
      $region51: #{tpu_custom_call.1} parent=5 // pred_region
        %s433 = ssub.s32 %s16, 2
        // Predicated region
        $region53: #{tpu_custom_call.1} parent=51 // pred_check
          %p434 = pneg %p113
        $region54: #{tpu_custom_call.1} parent=51 // pred_check_branch
          %436 = sbr.rel (%p434) target = $region56
        $region55: #{tpu_custom_call.1} parent=51 // pred_region
          %s437 = sand.u32 %s98, 1
          %s438 = scalar_lea.sflag [#allocation4], %s437
          %s439 = sand.u32 %s98, 1
          %s440 = smul.addr %s439, 8
          %s441 = scalar_lea.vmem [#allocation8], %s440
          %442 = dma.done %s438, 128
        $region56: #{tpu_custom_call.1} parent=51 // pred_fallthru
          _
      $region52: #{tpu_custom_call.1} parent=5 // pred_fallthru
        _
    $region6: #{tpu_custom_call.1} parent=1 // loop_footer
      %s20 = sadd.s32 1, %s16
    $region7: #{tpu_custom_call.1} parent=1 // loop_footer_branch
      %15 = sbr.rel target = $region3
    $region8: #{tpu_custom_call.1} parent=1 // loop_exit
      _
    %443 = vsyncpa [#allocation3], 1
    %s444 = scalar_lea.sflag [#allocation3], 1
    %445 = vsyncpa %s444, 1
    %446 = vsyncpa [#allocation6], 1
    %447 = vsyncpa [#allocation4], 1
    %s448 = scalar_lea.sflag [#allocation4], 1
    %449 = vsyncpa %s448, 1

</llo_original>
